<compile_context>
chip_gen: v5e
topology: v5e:2x2
jax: 0.10.0
libtpu: 0.0.40
codegen_flags: <defaults>
</compile_context>

<pallas_src>
import functools

import jax
import jax.numpy as jnp
from jax.experimental import pallas as pl
from jax.experimental.pallas import tpu as pltpu

_MASK_VALUE = -1e30          # finite "minus infinity" for padded key columns
_MIB = 1024 * 1024


def _round_up(x, m):
    return ((x + m - 1) // m) * m


def _itemsize(dtype):
    return jnp.dtype(dtype).itemsize


def _vmem_budget():
    """~80% of per-core physical VMEM (v7x ~51 MiB, v5e/v6e ~102 MiB)."""
    try:
        cap = int(pltpu.get_tpu_info().vmem_capacity_bytes)
    except Exception:
        cap = 64 * _MIB          # conservative fallback
    return max(int(0.8 * cap), 16 * _MIB)


def _pick_tile(dim, preferred):
    """Largest multiple of 128 <= preferred that divides dim (dim % 128 == 0)."""
    t = (min(dim, max(preferred, 128)) // 128) * 128
    while t > 128 and dim % t:
        t -= 128
    return max(t, 128)


def _probe_buffered():
    if not hasattr(pl, "Buffered"):
        return False
    try:
        pl.BlockSpec((8, 128), lambda i: (0, 0), pipeline_mode=pl.Buffered(1))
        return True
    except Exception:
        return False


_HAS_BUFFERED = _probe_buffered()


def _const_spec(shape, index_map):
    """BlockSpec for a block whose contents never change: single-buffered."""
    if _HAS_BUFFERED:
        return pl.BlockSpec(shape, index_map, pipeline_mode=pl.Buffered(1))
    return pl.BlockSpec(shape, index_map)


# --------------------------------------------------------------------------
# Kernel 1: V = embedding @ W^T + b   (tiled over batch x seq tiles)
# --------------------------------------------------------------------------
def _value_proj_kernel(emb_ref, wt_ref, b_ref, v_ref, *, mxu_dtype):
    # emb_ref: (1, ts, Hp)   wt_ref: (Hp, Hp) = W^T in MXU dtype   b_ref: (1, Hp) f32
    acc = jnp.dot(emb_ref[0].astype(mxu_dtype), wt_ref[...],
                  preferred_element_type=jnp.float32)
    acc = acc + b_ref[...]
    v_ref[0] = acc.astype(v_ref.dtype)


def _value_projection(emb, wt, bias2d, *, v_dtype, mxu_dtype, budget):
    B, Sp, Hp = emb.shape
    wbuf = 1 if _HAS_BUFFERED else 2
    fixed = wbuf * (Hp * Hp * _itemsize(wt.dtype) + 8 * Hp * 4)

    def need(ts):
        return (fixed
                + 2 * ts * Hp * _itemsize(emb.dtype)     # input tile (2-buf)
                + 2 * ts * Hp * _itemsize(v_dtype)       # output tile (2-buf)
                + 2 * ts * Hp * 4)                       # f32 acc / cast temps

    ts = _pick_tile(Sp, 1024)                            # big rows: mem-bound GEMM
    while ts > 128 and need(ts) > budget:
        ts = _pick_tile(Sp, ts - 128)

    kernel = functools.partial(_value_proj_kernel, mxu_dtype=mxu_dtype)
    return pl.pallas_call(
        kernel,
        out_shape=jax.ShapeDtypeStruct((B, Sp, Hp), v_dtype),
        grid_spec=pltpu.PrefetchScalarGridSpec(
            num_scalar_prefetch=0,
            grid=(B, Sp // ts),
            in_specs=[
                pl.BlockSpec((1, ts, Hp), lambda b, i: (b, i, 0)),
                _const_spec((Hp, Hp), lambda b, i: (0, 0)),
                _const_spec((1, Hp), lambda b, i: (0, 0)),
            ],
            out_specs=pl.BlockSpec((1, ts, Hp), lambda b, i: (b, i, 0)),
        ),
        compiler_params=pltpu.CompilerParams(
            dimension_semantics=("parallel", "parallel"),
            vmem_limit_bytes=min(budget, max(2 * need(ts), 16 * _MIB)),
        ),
    )(emb, wt, bias2d)


# --------------------------------------------------------------------------
# Kernel 2: out = (softmax(A) @ V) @ W^T + b
#   flash-style online softmax over key tiles, output projection fused into
#   the epilogue on the VMEM-resident f32 accumulator.
# --------------------------------------------------------------------------
def _attn_out_kernel(attn_ref, v_ref, wt_ref, b_ref, o_ref,
                     m_sc, l_sc, acc_sc, *, block_k, v_resident, mxu_dtype):
    ki = pl.program_id(2)

    @pl.when(ki == 0)
    def _init():
        m_sc[...] = jnp.full(m_sc.shape, -jnp.inf, dtype=m_sc.dtype)
        l_sc[...] = jnp.zeros(l_sc.shape, dtype=l_sc.dtype)
        acc_sc[...] = jnp.zeros(acc_sc.shape, dtype=acc_sc.dtype)

    s = attn_ref[0].astype(jnp.float32)                  # (tq, tk) logits, f32
    if v_resident:
        # V is resident for the whole batch: slice the current key tile.
        k0 = pl.multiple_of(ki * block_k, block_k)
        v = v_ref[0, pl.ds(k0, block_k), :]              # (tk, Hp)
    else:
        v = v_ref[0]                                     # (tk, Hp) streamed tile

    m_prev = m_sc[...]
    m_new = jnp.maximum(m_prev, jnp.max(s, axis=-1, keepdims=True))
    alpha = jnp.exp(m_prev - m_new)                      # rescale old partials
    p = jnp.exp(s - m_new)                               # unnormalized probs, f32
    l_sc[...] = alpha * l_sc[...] + jnp.sum(p, axis=-1, keepdims=True)
    acc_sc[...] = alpha * acc_sc[...] + jnp.dot(
        p.astype(mxu_dtype), v.astype(mxu_dtype),
        preferred_element_type=jnp.float32)
    m_sc[...] = m_new

    @pl.when(ki == pl.num_programs(2) - 1)
    def _finalize():
        inv_l = pl.reciprocal(l_sc[...], approx=False)   # exact, off critical path
        ctx = (acc_sc[...] * inv_l).astype(mxu_dtype)    # (tq, Hp)
        out = jnp.dot(ctx, wt_ref[...], preferred_element_type=jnp.float32)
        out = out + b_ref[...]
        o_ref[0] = out.astype(o_ref.dtype)


def _flash_attn_output(attn, v, wt, bias2d, out_dtype, *,
                       tile_q, tile_k, mxu_dtype, budget):
    B, Sp, _ = attn.shape
    Hp = wt.shape[-1]
    tq = _pick_tile(Sp, tile_q)
    tk = _pick_tile(Sp, tile_k)
    # v7x has 2 TensorCores sharding the parallel (batch, q-tile) axes: make
    # sure there are at least 2 units of parallel work.
    if B * (Sp // tq) < 2 and tq > 128:
        tq = _pick_tile(Sp, tq // 2)

    wbuf = 1 if _HAS_BUFFERED else 2
    fixed = wbuf * (Hp * Hp * _itemsize(wt.dtype) + 8 * Hp * 4)

    def need(tq_, tk_, resident):
        v_bytes = (wbuf * Sp * Hp if resident else 2 * tk_ * Hp) * _itemsize(v.dtype)
        return (fixed + v_bytes
                + 2 * tq_ * tk_ * _itemsize(attn.dtype)   # attention tile (2-buf)
                + 2 * tq_ * Hp * _itemsize(out_dtype)     # output tile (2-buf)
                + tq_ * Hp * 4 + 2 * tq_ * 128 * 4        # f32 accumulators
                + 3 * tq_ * tk_ * 4)                      # f32 softmax temporaries

    # Keep V resident per batch when it fits: DMA'd once per batch instead of
    # once per (q, k) step.
    v_resident = need(tq, tk, True) <= budget
    if not v_resident:
        # Cannot keep V resident: grow tq to cut the V re-read factor Sp/tq.
        while (tq * 2 <= min(Sp, 1024) and Sp % (tq * 2) == 0
               and need(tq * 2, tk, False) <= budget):
            tq *= 2
        while need(tq, tk, False) > budget and tk > 128:
            tk = _pick_tile(Sp, tk - 128)
        while need(tq, tk, False) > budget and tq > 128:
            tq = _pick_tile(Sp, tq - 128)

    if v_resident:
        v_spec = _const_spec((1, Sp, Hp), lambda b, q, k: (b, 0, 0))
    else:
        v_spec = pl.BlockSpec((1, tk, Hp), lambda b, q, k: (b, k, 0))

    kernel = functools.partial(_attn_out_kernel, block_k=tk,
                               v_resident=v_resident, mxu_dtype=mxu_dtype)
    return pl.pallas_call(
        kernel,
        out_shape=jax.ShapeDtypeStruct((B, Sp, Hp), out_dtype),
        grid_spec=pltpu.PrefetchScalarGridSpec(
            num_scalar_prefetch=0,
            grid=(B, Sp // tq, Sp // tk),            # key-tile reduction axis last
            in_specs=[
                pl.BlockSpec((1, tq, tk), lambda b, q, k: (b, q, k)),
                v_spec,
                _const_spec((Hp, Hp), lambda b, q, k: (0, 0)),
                _const_spec((1, Hp), lambda b, q, k: (0, 0)),
            ],
            out_specs=pl.BlockSpec((1, tq, Hp), lambda b, q, k: (b, q, 0)),
            scratch_shapes=[
                pltpu.VMEM((tq, 1), jnp.float32),    # running max
                pltpu.VMEM((tq, 1), jnp.float32),    # running sum
                pltpu.VMEM((tq, Hp), jnp.float32),   # output accumulator
            ],
        ),
        compiler_params=pltpu.CompilerParams(
            dimension_semantics=("parallel", "parallel", "arbitrary"),
            vmem_limit_bytes=min(budget,
                                 max(2 * need(tq, tk, v_resident), 16 * _MIB)),
        ),
    )(attn, v, wt, bias2d)


# --------------------------------------------------------------------------
# Wrapper: AttentionOutput.forward
# --------------------------------------------------------------------------
def attention_output(embedding, attention_matrix, weight, bias, *,
                     tile_q=256, tile_k=512):
    """value_layer(softmax(attention_matrix) @ value_layer(embedding))."""
    B, S, H = embedding.shape
    assert attention_matrix.shape == (B, S, S)
    assert weight.shape == (H, H)
    assert bias.shape == (H,)

    out_dtype = embedding.dtype
    # bf16 MXU operands (f32 accumulation) when inputs are f32.
    mxu_dtype = jnp.bfloat16 if embedding.dtype == jnp.float32 else embedding.dtype

    # Pad S and H to multiples of 128: (8,128)-aligned blocks, lane-dense
    # stores.  Padded key columns get a large negative logit (softmax -> ~0);
    # padded rows / feature columns are zero and sliced off at the end.
    Sp = _round_up(S, 128)
    Hp = _round_up(H, 128)
    pad_s, pad_h = Sp - S, Hp - H

    emb_p = embedding
    if pad_s or pad_h:
        emb_p = jnp.pad(embedding, ((0, 0), (0, pad_s), (0, pad_h)))
    attn_p = attention_matrix
    if pad_s:
        attn_p = jnp.pad(attention_matrix, ((0, 0), (0, pad_s), (0, pad_s)),
                         constant_values=_MASK_VALUE)
    w_p, b_p = weight, bias
    if pad_h:
        w_p = jnp.pad(weight, ((0, pad_h), (0, pad_h)))
        b_p = jnp.pad(bias, ((0, pad_h),))

    # One-time transpose + cast: both projections contract against Wt = W^T
    # directly (no in-kernel transposes).
    wt = w_p.T.astype(mxu_dtype)
    bias2d = b_p.reshape(1, Hp).astype(jnp.float32)

    budget = _vmem_budget()

    # Kernel 1: V, stored in the MXU dtype (halves V HBM traffic for f32 in).
    v = _value_projection(emb_p, wt, bias2d, v_dtype=mxu_dtype,
                          mxu_dtype=mxu_dtype, budget=budget)

    # Kernel 2: flash softmax + fused output projection.
    out = _flash_attn_output(attn_p, v, wt, bias2d, out_dtype,
                             tile_q=tile_q, tile_k=tile_k,
                             mxu_dtype=mxu_dtype, budget=budget)
    if pad_s or pad_h:
        out = out[:, :S, :H]
    return out


def reference(embedding, attention_matrix, weight, bias):
    v = embedding @ weight.T + bias
    sm = jax.nn.softmax(attention_matrix, axis=-1)
    return (sm @ v) @ weight.T + bias


if __name__ == "__main__":
    B, S, H = 2, 8, 32
    key = jax.random.PRNGKey(0)
    k_emb, k_attn, k_w, k_b = jax.random.split(key, 4)

    embedding = jax.random.normal(k_emb, (B, S, H), dtype=jnp.float32)
    attention_matrix = jax.random.normal(k_attn, (B, S, S), dtype=jnp.float32)

    # nn.Linear-style parameters: W (H, H), b (H,)
    bound = 1.0 / (H ** 0.5)
    weight = jax.random.uniform(k_w, (H, H), minval=-bound, maxval=bound,
                                dtype=jnp.float32)
    bias = jax.random.uniform(k_b, (H,), minval=-bound, maxval=bound,
                              dtype=jnp.float32)

    out = attention_output(embedding, attention_matrix, weight, bias)
    out = jax.block_until_ready(out)

    ref = reference(embedding, attention_matrix, weight, bias)
    assert out.shape == (B, S, H)
    # bf16 MXU operands (with f32 accumulation) -> loosened tolerance vs the
    # pure-f32 reference.
    err = float(jnp.max(jnp.abs(out - ref)))
    assert jnp.allclose(out, ref, atol=2e-2, rtol=2e-2), err

    print("KERNEL_OK")
</pallas_src>

<mosaic_0001>
module attributes {stable_mosaic.version = 11 : i64} {
  func.func @_value_proj_kernel(%arg0: i32, %arg1: i32, %arg2: memref<1x128x128xf32, #tpu.memory_space<vmem>>, %arg3: memref<128x128xbf16, #tpu.memory_space<vmem>>, %arg4: memref<1x128xf32, #tpu.memory_space<vmem>>, %arg5: memref<1x128x128xbf16, #tpu.memory_space<vmem>>) attributes {dimension_semantics = [#tpu.dimension_semantics<parallel>, #tpu.dimension_semantics<parallel>], iteration_bounds = array<i64: 2, 1>, scalar_prefetch = 0 : i64, scratch_operands = 0 : i64, tpu.core_type = #tpu.core_type<tc>, window_params = [{transform_indices = @transform_0, window_bounds = array<i64: 1, 128, 128>}, {pipeline_mode = #tpu.pipeline_mode<synchronous>, transform_indices = @transform_1, window_bounds = array<i64: 128, 128>}, {pipeline_mode = #tpu.pipeline_mode<synchronous>, transform_indices = @transform_2, window_bounds = array<i64: 1, 128>}, {transform_indices = @transform_3, window_bounds = array<i64: 1, 128, 128>}]} {
    %c0 = arith.constant 0 : index
    %c0_0 = arith.constant 0 : index
    %c0_1 = arith.constant 0 : index
    %0 = vector.load %arg2[%c0, %c0_0, %c0_1] : memref<1x128x128xf32, #tpu.memory_space<vmem>>, vector<1x128x128xf32>
    %1 = vector.shape_cast %0 : vector<1x128x128xf32> to vector<128x128xf32>
    %2 = arith.truncf %1 : vector<128x128xf32> to vector<128x128xbf16>
    %c0_2 = arith.constant 0 : index
    %c0_3 = arith.constant 0 : index
    %3 = vector.load %arg3[%c0_2, %c0_3] : memref<128x128xbf16, #tpu.memory_space<vmem>>, vector<128x128xbf16>
    %cst = arith.constant dense<0.000000e+00> : vector<128x128xf32>
    %4 = tpu.matmul %2, %3, %cst {dimension_numbers = #tpu.dot_dimension_numbers<[1], [0], [0], [1], [0, 0, 1, 1], [], []>} : vector<128x128xbf16>, vector<128x128xbf16>, vector<128x128xf32> -> vector<128x128xf32>
    %c0_4 = arith.constant 0 : index
    %c0_5 = arith.constant 0 : index
    %5 = vector.load %arg4[%c0_4, %c0_5] : memref<1x128xf32, #tpu.memory_space<vmem>>, vector<1x128xf32>
    %6 = vector.broadcast %5 : vector<1x128xf32> to vector<128x128xf32>
    %7 = arith.addf %4, %6 : vector<128x128xf32>
    %8 = arith.truncf %7 : vector<128x128xf32> to vector<128x128xbf16>
    %c0_6 = arith.constant 0 : index
    %c0_7 = arith.constant 0 : index
    %c0_8 = arith.constant 0 : index
    %9 = vector.load %arg5[%c0_6, %c0_7, %c0_8] : memref<1x128x128xbf16, #tpu.memory_space<vmem>>, vector<1x128x128xbf16>
    %10 = vector.shape_cast %9 : vector<1x128x128xbf16> to vector<128x128xbf16>
    %11 = vector.shape_cast %8 : vector<128x128xbf16> to vector<1x128x128xbf16>
    tpu.vector_store %arg5[%c0_6, %c0_7, %c0_8], %11 {strides = array<i32>} : memref<1x128x128xbf16, #tpu.memory_space<vmem>>, vector<1x128x128xbf16>,
    return
  }
  func.func @transform_0(%arg0: i32, %arg1: i32) -> (i32, i32, i32) {
    %c0_i32 = arith.constant 0 : i32
    %c0_i32_0 = arith.constant 0 : i32
    return %arg0, %arg1, %c0_i32 : i32, i32, i32
  }
  func.func @transform_1(%arg0: i32, %arg1: i32) -> (i32, i32) {
    %c0_i32 = arith.constant 0 : i32
    %c0_i32_0 = arith.constant 0 : i32
    %c0_i32_1 = arith.constant 0 : i32
    return %c0_i32, %c0_i32_0 : i32, i32
  }
  func.func @transform_2(%arg0: i32, %arg1: i32) -> (i32, i32) {
    %c0_i32 = arith.constant 0 : i32
    %c0_i32_0 = arith.constant 0 : i32
    %c0_i32_1 = arith.constant 0 : i32
    return %c0_i32, %c0_i32_0 : i32, i32
  }
  func.func @transform_3(%arg0: i32, %arg1: i32) -> (i32, i32, i32) {
    %c0_i32 = arith.constant 0 : i32
    %c0_i32_0 = arith.constant 0 : i32
    return %arg0, %arg1, %c0_i32 : i32, i32, i32
  }
}

</mosaic_0001>

<llo_original>
// kernel: tpu_custom_call.1
$region0: #{tpu_custom_call.1}
  #allocation0 [shape = 'u32[]', space=smem, size = 0x4, offset = 0x4, fixed_abs, tag = 'smem constant byte address 0x4 - core index']
  #allocation1 [shape = 'u32[72,128]{1,0:T(1,128)}', space=vmem, size = 0x9000, scoped, tag = 'internal scratch']
  %s0 = inlined_call_operand.hbm [shape: f32[2,128,128], index: 0, kind: input, shape index: {}]
  %s1 = inlined_call_operand.hbm [shape: bf16[128,128], index: 1, kind: input, shape index: {}]
  %s2 = inlined_call_operand.vmem [shape: f32[1,128], index: 2, kind: input, shape index: {}]
  %s3 = inlined_call_operand.hbm [shape: bf16[2,128,128], index: 3, kind: output, shape index: {}]
  %s4 = sld [smem:[#allocation0]]
  $region53: #{tpu_custom_call.1} parent=0
    _
  %s6 = ssub.s32 1, %s4
  %s7 = scalar_select 0, %s6, %s4
  $region1: #{tpu_custom_call.1} parent=0
    #allocation2 [shape = 'u8[131072]{0}', space=vmem, size = 0x20000, scoped, tag = 'input window, operand 0']
    #allocation3 [shape = 's32[2]{0}', space=sflag, size = 0x8, scoped, tag = 'scoped memory for tpu_custom_call.1']
    #allocation4 [shape = 's32[2]{0}', space=sflag, size = 0x8, scoped, tag = 'scoped memory for tpu_custom_call.1']
    #allocation5 [shape = 'u8[32768]{0}', space=vmem, size = 0x8000, scoped, tag = 'input window, operand 1, single buffered']
    #allocation6 [shape = 's32[1]{0}', space=sflag, size = 0x4, scoped, tag = 'scoped memory for tpu_custom_call.1']
    #allocation7 [shape = 'u8[65536]{0}', space=vmem, size = 0x10000, scoped, tag = 'output window, operand 0']
    %8 = vsyncpa [#allocation3], 0
    %s9 = scalar_lea.sflag [#allocation3], 1
    %10 = vsyncpa %s9, 0
    %11 = vsyncpa [#allocation6], 0
    %12 = vsyncpa [#allocation4], 0
    %s13 = scalar_lea.sflag [#allocation4], 1
    %14 = vsyncpa %s13, 0
    loop: start=0, step=1, limit=4
    $region2: #{tpu_custom_call.1} parent=1 // loop_pre_header
      _
    $region3: #{tpu_custom_call.1} parent=1 // loop_header
      %s16 = sphi 0, %s20
      %p17 = scmp.ge.s32.totalorder %s16, 4
      %s23 = sphi 0, %s35
      %s24 = sphi 0, %s31
      %s25 = sphi 0, %s23
      %s26 = sphi 0, %s24
      %s27 = sphi 0, %s25
      %s28 = sphi 0, %s26
      %s40 = sphi 0, %s42
      %s43 = sphi 0, %s40
      %s44 = sphi 0, %s43
      %s60 = sphi 0, %s44
      %s64 = sphi 0, %s64
      %s66 = sphi 0, %s64
      %s67 = sphi 0, %s66
      %s81 = sphi 0, %s67
      %s85 = sphi 0, %s85
      %s87 = sphi 0, %s85
      %s88 = sphi 0, %s87
      %s102 = sphi 0, %s88
      %s110 = sphi 0, %s112
      %s113 = sphi 0, %s110
      %s114 = sphi 0, %s113
      %s130 = sphi 0, %s114
    $region4: #{tpu_custom_call.1} parent=1 // loop_header_branch
      %19 = sbr.rel (%p17) target = $region8
    $region5: #{tpu_custom_call.1} parent=1 // loop_body
      %s21 = ssub.s32 %s16, 1
      %s22 = ssub.s32 %s16, 2
      %s29 = sadd.s32 1, %s24
      %p30 = scmp.ge.s32.totalorder %s29, 1
      %s31 = scalar_select %p30, 0, %s29
      %s32 = sadd.s32 1, %s23
      %s33 = scalar_select %p30, %s32, %s23
      %p34 = scmp.ge.s32.totalorder %s33, 2
      %s35 = scalar_select %p34, 0, %s33
      %s36 = ssub.s32 %s23, %s35
      %s37 = ssub.s32 %s24, %s31
      %s38 = sor.u32 %s36, %s37
      %p39 = scmp.eq.s32.totalorder %s38, 0
      %s41 = sadd.s32 %s40, 1
      %s42 = scalar_select %p39, %s40, %s41
      %p45 = pneg %p39
      %p46 = scmp.eq.s32.totalorder %s16, 1
      %p47 = por %p45, %p46
      %p48 = scmp.ne.s32.totalorder %s40, %s43
      %p49 = scmp.eq.s32.totalorder %s16, 0
      %p50 = por %p48, %p49
      %p51 = scmp.ne.s32.totalorder %s40, %s43
      %p52 = scmp.eq.s32.totalorder %s21, 1
      %p53 = por %p51, %p52
      %p54 = scmp.ne.s32.totalorder %s43, %s44
      %p55 = scmp.eq.s32.totalorder %s21, 0
      %p56 = por %p54, %p55
      %p57 = scmp.ne.s32.totalorder %s43, %s44
      %p58 = scmp.eq.s32.totalorder %s22, 1
      %p59 = por %p57, %p58
      %p61 = scmp.ne.s32.totalorder %s44, %s60
      %p62 = scmp.eq.s32.totalorder %s22, 0
      %p63 = por %p61, %p62
      %s65 = sadd.s32 %s64, 1
      %p68 = scmp.eq.s32.totalorder %s16, 1
      %p69 = scmp.ne.s32.totalorder %s64, %s66
      %p70 = scmp.eq.s32.totalorder %s16, 0
      %p71 = por %p69, %p70
      %p72 = scmp.ne.s32.totalorder %s64, %s66
      %p73 = scmp.eq.s32.totalorder %s21, 1
      %p74 = por %p72, %p73
      %p75 = scmp.ne.s32.totalorder %s66, %s67
      %p76 = scmp.eq.s32.totalorder %s21, 0
      %p77 = por %p75, %p76
      %p78 = scmp.ne.s32.totalorder %s66, %s67
      %p79 = scmp.eq.s32.totalorder %s22, 1
      %p80 = por %p78, %p79
      %p82 = scmp.ne.s32.totalorder %s67, %s81
      %p83 = scmp.eq.s32.totalorder %s22, 0
      %p84 = por %p82, %p83
      %s86 = sadd.s32 %s85, 1
      %p89 = scmp.eq.s32.totalorder %s16, 1
      %p90 = scmp.ne.s32.totalorder %s85, %s87
      %p91 = scmp.eq.s32.totalorder %s16, 0
      %p92 = por %p90, %p91
      %p93 = scmp.ne.s32.totalorder %s85, %s87
      %p94 = scmp.eq.s32.totalorder %s21, 1
      %p95 = por %p93, %p94
      %p96 = scmp.ne.s32.totalorder %s87, %s88
      %p97 = scmp.eq.s32.totalorder %s21, 0
      %p98 = por %p96, %p97
      %p99 = scmp.ne.s32.totalorder %s87, %s88
      %p100 = scmp.eq.s32.totalorder %s22, 1
      %p101 = por %p99, %p100
      %p103 = scmp.ne.s32.totalorder %s88, %s102
      %p104 = scmp.eq.s32.totalorder %s22, 0
      %p105 = por %p103, %p104
      %s106 = ssub.s32 %s23, %s35
      %s107 = ssub.s32 %s24, %s31
      %s108 = sor.u32 %s106, %s107
      %p109 = scmp.eq.s32.totalorder %s108, 0
      %s111 = sadd.s32 %s110, 1
      %s112 = scalar_select %p109, %s110, %s111
      %p115 = pneg %p109
      %p116 = scmp.eq.s32.totalorder %s16, 1
      %p117 = por %p115, %p116
      %p118 = scmp.ne.s32.totalorder %s110, %s113
      %p119 = scmp.eq.s32.totalorder %s16, 0
      %p120 = por %p118, %p119
      %p121 = scmp.ne.s32.totalorder %s110, %s113
      %p122 = scmp.eq.s32.totalorder %s21, 1
      %p123 = por %p121, %p122
      %p124 = scmp.ne.s32.totalorder %s113, %s114
      %p125 = scmp.eq.s32.totalorder %s21, 0
      %p126 = por %p124, %p125
      %p127 = scmp.ne.s32.totalorder %s113, %s114
      %p128 = scmp.eq.s32.totalorder %s22, 1
      %p129 = por %p127, %p128
      %p131 = scmp.ne.s32.totalorder %s114, %s130
      %p132 = scmp.eq.s32.totalorder %s22, 0
      %p133 = por %p131, %p132
      %p134 = scmp.le.s32.totalorder 1, %s16
      %p135 = scmp.lt.s32.totalorder %s16, 3
      %p136 = pnand %p134, %p135
      %p137 = pneg %p136
      // Predicated region
      $region9: #{tpu_custom_call.1} parent=5 // pred_check
        _
      $region10: #{tpu_custom_call.1} parent=5 // pred_check_branch
        %139 = sbr.rel (%p136) target = $region12
      $region11: #{tpu_custom_call.1} parent=5 // pred_region
        %s140 = ssub.s32 %s16, 1
        // Predicated region
        $region13: #{tpu_custom_call.1} parent=11 // pred_check
          %p141 = pneg %p77
        $region14: #{tpu_custom_call.1} parent=11 // pred_check_branch
          %143 = sbr.rel (%p141) target = $region16
        $region15: #{tpu_custom_call.1} parent=11 // pred_region
          %145 = vsyncadd [#allocation6], 0
          %s146 = sshll.u32 %s1, 4
          %s147 = int_to_ptr.hbm [resolvable:$true] %s146
          %s148 = sshll.u32 [#allocation5], 4
          %s149 = int_to_ptr.vmem [resolvable:$true] %s148
          %154 = dma.hbm_to_vmem [thread:$0]  %s147, 1024, %s149, [#allocation6], 64, 64, 4
        $region16: #{tpu_custom_call.1} parent=11 // pred_fallthru
          _
        // Predicated region
        $region17: #{tpu_custom_call.1} parent=11 // pred_check
          %p155 = pneg %p98
        $region18: #{tpu_custom_call.1} parent=11 // pred_check_branch
          %157 = sbr.rel (%p155) target = $region20
        $region19: #{tpu_custom_call.1} parent=11 // pred_region
          _
        $region20: #{tpu_custom_call.1} parent=11 // pred_fallthru
          _
      $region12: #{tpu_custom_call.1} parent=5 // pred_fallthru
        _
      %p158 = scmp.lt.s32.totalorder %s16, 2
      // Predicated region
      $region21: #{tpu_custom_call.1} parent=5 // pred_check
        %p159 = pneg %p158
      $region22: #{tpu_custom_call.1} parent=5 // pred_check_branch
        %161 = sbr.rel (%p159) target = $region24
      $region23: #{tpu_custom_call.1} parent=5 // pred_region
        // Predicated region
        $region25: #{tpu_custom_call.1} parent=23 // pred_check
          %p162 = pneg %p50
        $region26: #{tpu_custom_call.1} parent=23 // pred_check_branch
          %164 = sbr.rel (%p162) target = $region28
        $region27: #{tpu_custom_call.1} parent=23 // pred_region
          %s165 = sand.u32 %s40, 1
          %s166 = scalar_lea.sflag [#allocation3], %s165
          %s167 = sand.u32 %s40, 1
          %s168 = smul.addr %s167, 128
          %s169 = scalar_lea.vmem [#allocation2], %s168
          %s170 = smul.u32 16, %s24
          %172 = vsyncadd %s166, 0
          %s173 = smul.addr %s23, 16
          %s174 = sadd.s32 %s170, %s173
          %s175 = smul.addr %s174, 8
          %s176 = scalar_lea.hbm %s0, %s175
          %s177 = sshll.u32 %s176, 4
          %s178 = int_to_ptr.hbm [resolvable:$true] %s177
          %s179 = sshll.u32 %s169, 4
          %s180 = int_to_ptr.vmem [resolvable:$true] %s179
          %185 = dma.hbm_to_vmem [thread:$0]  %s178, 2048, %s180, %s166, 128, 128, 8
        $region28: #{tpu_custom_call.1} parent=23 // pred_fallthru
          _
      $region24: #{tpu_custom_call.1} parent=5 // pred_fallthru
        _
      %p186 = scmp.le.s32.totalorder 1, %s16
      %p187 = scmp.lt.s32.totalorder %s16, 3
      %p188 = pnand %p186, %p187
      %p189 = pneg %p188
      // Predicated region
      $region29: #{tpu_custom_call.1} parent=5 // pred_check
        _
      $region30: #{tpu_custom_call.1} parent=5 // pred_check_branch
        %191 = sbr.rel (%p188) target = $region32
      $region31: #{tpu_custom_call.1} parent=5 // pred_region
        %s192 = ssub.s32 %s16, 1
        %s193 = sand.u32 %s43, 1
        %s194 = scalar_lea.sflag [#allocation3], %s193
        %s195 = sand.u32 %s43, 1
        %s196 = smul.addr %s195, 128
        %s197 = scalar_lea.vmem [#allocation2], %s196
        // Predicated region
        $region33: #{tpu_custom_call.1} parent=31 // pred_check
          %p198 = pneg %p56
        $region34: #{tpu_custom_call.1} parent=31 // pred_check_branch
          %200 = sbr.rel (%p198) target = $region36
        $region35: #{tpu_custom_call.1} parent=31 // pred_region
          %202 = dma.done %s194, 2048
        $region36: #{tpu_custom_call.1} parent=31 // pred_fallthru
          _
        // Predicated region
        $region37: #{tpu_custom_call.1} parent=31 // pred_check
          %p203 = pneg %p77
        $region38: #{tpu_custom_call.1} parent=31 // pred_check_branch
          %205 = sbr.rel (%p203) target = $region40
        $region39: #{tpu_custom_call.1} parent=31 // pred_region
          %207 = dma.done [#allocation6], 1024
        $region40: #{tpu_custom_call.1} parent=31 // pred_fallthru
          _
        %s208 = sand.u32 %s43, 1
        %s209 = scalar_lea.sflag [#allocation3], %s208
        %s210 = sand.u32 %s43, 1
        %s211 = smul.addr %s210, 128
        %s212 = scalar_lea.vmem [#allocation2], %s211
        %p213 = pneg %p56
        %p214 = pneg %p53
        %p215 = pneg %p77
        %p216 = pneg %p74
        %p217 = pneg %p98
        %p218 = pneg %p95
        %p219 = pneg %p126
        %p220 = pneg %p123
        %s221 = sand.u32 %s113, 1
        %s222 = scalar_lea.sflag [#allocation4], %s221
        %s223 = sand.u32 %s113, 1
        %s224 = smul.addr %s223, 64
        %s225 = scalar_lea.vmem [#allocation7], %s224
        %s226 = smul.u32 16, %s26
        %s227 = smul.u32 16, %s26
        %v228 = vld [vmem:[%s197] sm:$0xff]
        %v229 = vld [vmem:[%s197 + $0x8] sm:$0xff]
        %v230 = vld [vmem:[%s197 + $0x10] sm:$0xff]
        %v231 = vld [vmem:[%s197 + $0x18] sm:$0xff]
        %v232 = vld [vmem:[%s197 + $0x20] sm:$0xff]
        %v233 = vld [vmem:[%s197 + $0x28] sm:$0xff]
        %v234 = vld [vmem:[%s197 + $0x30] sm:$0xff]
        %v235 = vld [vmem:[%s197 + $0x38] sm:$0xff]
        %v236 = vld [vmem:[%s197 + $0x40] sm:$0xff]
        %v237 = vld [vmem:[%s197 + $0x48] sm:$0xff]
        %v238 = vld [vmem:[%s197 + $0x50] sm:$0xff]
        %v239 = vld [vmem:[%s197 + $0x58] sm:$0xff]
        %v240 = vld [vmem:[%s197 + $0x60] sm:$0xff]
        %v241 = vld [vmem:[%s197 + $0x68] sm:$0xff]
        %v242 = vld [vmem:[%s197 + $0x70] sm:$0xff]
        %v243 = vld [vmem:[%s197 + $0x78] sm:$0xff]
        %v244 = vpack.c.bf16 %v229, %v228
        %v245 = vpack.c.bf16 %v231, %v230
        %v246 = vpack.c.bf16 %v233, %v232
        %v247 = vpack.c.bf16 %v235, %v234
        %v248 = vpack.c.bf16 %v237, %v236
        %v249 = vpack.c.bf16 %v239, %v238
        %v250 = vpack.c.bf16 %v241, %v240
        %v251 = vpack.c.bf16 %v243, %v242
        %v252 = vld [vmem:[#allocation5] sm:$0xf]
        %v253 = vld [vmem:[#allocation5 + $0x4] sm:$0xf]
        %v254 = vld [vmem:[#allocation5 + $0x8] sm:$0xf]
        %v255 = vld [vmem:[#allocation5 + $0xc] sm:$0xf]
        %v256 = vld [vmem:[#allocation5 + $0x10] sm:$0xf]
        %v257 = vld [vmem:[#allocation5 + $0x14] sm:$0xf]
        %v258 = vld [vmem:[#allocation5 + $0x18] sm:$0xf]
        %v259 = vld [vmem:[#allocation5 + $0x1c] sm:$0xf]
        %v260 = vld [vmem:[#allocation5 + $0x20] sm:$0xf]
        %v261 = vld [vmem:[#allocation5 + $0x24] sm:$0xf]
        %v262 = vld [vmem:[#allocation5 + $0x28] sm:$0xf]
        %v263 = vld [vmem:[#allocation5 + $0x2c] sm:$0xf]
        %v264 = vld [vmem:[#allocation5 + $0x30] sm:$0xf]
        %v265 = vld [vmem:[#allocation5 + $0x34] sm:$0xf]
        %v266 = vld [vmem:[#allocation5 + $0x38] sm:$0xf]
        %v267 = vld [vmem:[#allocation5 + $0x3c] sm:$0xf]
        %v268 = vld [vmem:[%s2] sm:$0x1]
        %v270 = vperm.slane %v268, 0
        %v288 = vunpack.c.l.b16 %v252
        %v289 = vunpack.c.l.b16 %v253
        %v290 = vunpack.c.l.b16 %v254
        %v291 = vunpack.c.l.b16 %v255
        %v292 = vunpack.c.l.b16 %v256
        %v293 = vunpack.c.l.b16 %v257
        %v294 = vunpack.c.l.b16 %v258
        %v295 = vunpack.c.l.b16 %v259
        %v296 = vunpack.c.l.b16 %v260
        %v297 = vunpack.c.l.b16 %v261
        %v298 = vunpack.c.l.b16 %v262
        %v299 = vunpack.c.l.b16 %v263
        %v300 = vunpack.c.l.b16 %v264
        %v301 = vunpack.c.l.b16 %v265
        %v302 = vunpack.c.l.b16 %v266
        %v303 = vunpack.c.l.b16 %v267
        %v304 = vpack.c.b16 %v289, %v288
        %v305 = vpack.c.b16 %v291, %v290
        %v306 = vpack.c.b16 %v293, %v292
        %v307 = vpack.c.b16 %v295, %v294
        %v308 = vpack.c.b16 %v297, %v296
        %v309 = vpack.c.b16 %v299, %v298
        %v310 = vpack.c.b16 %v301, %v300
        %v311 = vpack.c.b16 %v303, %v302
        %320 = vmatpush.bf16.msra.mxu0 %v311
        %321 = vmatpush.bf16.msra.mxu0 %v310
        %322 = vmatpush.bf16.msra.mxu0 %v309
        %323 = vmatpush.bf16.msra.mxu0 %v308
        %324 = vmatpush.bf16.msra.mxu0 %v307
        %325 = vmatpush.bf16.msra.mxu0 %v306
        %326 = vmatpush.bf16.msra.mxu0 %v305
        %327 = vmatpush.bf16.msra.mxu0 %v304
        %328 = vmatmul.bf16.gmra.mxu0 %v244
        %v329 = vpop.f32.mrf.mxu0
        %v330 = vadd.f32 %v270, %v329
        %v331 = vpop.f32.mrf.mxu0
        %v332 = vadd.f32 %v270, %v331
        %333 = vmatmul.bf16.gmra.mxu0 %v245
        %v334 = vpop.f32.mrf.mxu0
        %v335 = vadd.f32 %v270, %v334
        %v336 = vpop.f32.mrf.mxu0
        %v337 = vadd.f32 %v270, %v336
        %338 = vmatmul.bf16.gmra.mxu0 %v246
        %v339 = vpop.f32.mrf.mxu0
        %v340 = vadd.f32 %v270, %v339
        %v341 = vpop.f32.mrf.mxu0
        %v342 = vadd.f32 %v270, %v341
        %343 = vmatmul.bf16.gmra.mxu0 %v247
        %v344 = vpop.f32.mrf.mxu0
        %v345 = vadd.f32 %v270, %v344
        %v346 = vpop.f32.mrf.mxu0
        %v347 = vadd.f32 %v270, %v346
        %348 = vmatmul.bf16.gmra.mxu0 %v248
        %v349 = vpop.f32.mrf.mxu0
        %v350 = vadd.f32 %v270, %v349
        %v351 = vpop.f32.mrf.mxu0
        %v352 = vadd.f32 %v270, %v351
        %353 = vmatmul.bf16.gmra.mxu0 %v249
        %v354 = vpop.f32.mrf.mxu0
        %v355 = vadd.f32 %v270, %v354
        %v356 = vpop.f32.mrf.mxu0
        %v357 = vadd.f32 %v270, %v356
        %358 = vmatmul.bf16.gmra.mxu0 %v250
        %v359 = vpop.f32.mrf.mxu0
        %v360 = vadd.f32 %v270, %v359
        %v361 = vpop.f32.mrf.mxu0
        %v362 = vadd.f32 %v270, %v361
        %363 = vmatmul.bf16.gmra.mxu0 %v251
        %v364 = vpop.f32.mrf.mxu0
        %v365 = vadd.f32 %v270, %v364
        %v366 = vpop.f32.mrf.mxu0
        %v367 = vadd.f32 %v270, %v366
        %368 = vdwg.mxu0
        %v369 = vpack.c.bf16 %v330, %v330
        %v370 = vpack.c.bf16 %v332, %v332
        %v371 = vpack.c.bf16 %v335, %v335
        %v372 = vpack.c.bf16 %v337, %v337
        %v373 = vpack.c.bf16 %v340, %v340
        %v374 = vpack.c.bf16 %v342, %v342
        %v375 = vpack.c.bf16 %v345, %v345
        %v376 = vpack.c.bf16 %v347, %v347
        %v377 = vpack.c.bf16 %v350, %v350
        %v378 = vpack.c.bf16 %v352, %v352
        %v379 = vpack.c.bf16 %v355, %v355
        %v380 = vpack.c.bf16 %v357, %v357
        %v381 = vpack.c.bf16 %v360, %v360
        %v382 = vpack.c.bf16 %v362, %v362
        %v383 = vpack.c.bf16 %v365, %v365
        %v384 = vpack.c.bf16 %v367, %v367
        %385 = vst [vmem:[%s225] sm:$0xf] %v369
        %386 = vst [vmem:[%s225 + $0x4] sm:$0xf] %v370
        %387 = vst [vmem:[%s225 + $0x8] sm:$0xf] %v371
        %388 = vst [vmem:[%s225 + $0xc] sm:$0xf] %v372
        %389 = vst [vmem:[%s225 + $0x10] sm:$0xf] %v373
        %390 = vst [vmem:[%s225 + $0x14] sm:$0xf] %v374
        %391 = vst [vmem:[%s225 + $0x18] sm:$0xf] %v375
        %392 = vst [vmem:[%s225 + $0x1c] sm:$0xf] %v376
        %393 = vst [vmem:[%s225 + $0x20] sm:$0xf] %v377
        %394 = vst [vmem:[%s225 + $0x24] sm:$0xf] %v378
        %395 = vst [vmem:[%s225 + $0x28] sm:$0xf] %v379
        %396 = vst [vmem:[%s225 + $0x2c] sm:$0xf] %v380
        %397 = vst [vmem:[%s225 + $0x30] sm:$0xf] %v381
        %398 = vst [vmem:[%s225 + $0x34] sm:$0xf] %v382
        %399 = vst [vmem:[%s225 + $0x38] sm:$0xf] %v383
        %400 = vst [vmem:[%s225 + $0x3c] sm:$0xf] %v384
        %s401 = sand.u32 %s113, 1
        %s402 = scalar_lea.sflag [#allocation4], %s401
        %s403 = sand.u32 %s113, 1
        %s404 = smul.addr %s403, 64
        %s405 = scalar_lea.vmem [#allocation7], %s404
        // Predicated region
        $region41: #{tpu_custom_call.1} parent=31 // pred_check
          %p406 = pneg %p123
        $region42: #{tpu_custom_call.1} parent=31 // pred_check_branch
          %408 = sbr.rel (%p406) target = $region44
        $region43: #{tpu_custom_call.1} parent=31 // pred_region
          %s409 = smul.u32 16, %s26
          %411 = vsyncadd %s402, 0
          %s412 = smul.addr %s25, 16
          %s413 = sadd.s32 %s409, %s412
          %s414 = smul.addr %s413, 4
          %s415 = scalar_lea.hbm %s3, %s414
          %s416 = sshll.u32 %s405, 4
          %s417 = int_to_ptr.vmem [resolvable:$true] %s416
          %s418 = sshll.u32 %s415, 4
          %s419 = int_to_ptr.hbm [resolvable:$true] %s418
          %424 = dma.vmem_to_hbm [thread:$0]  %s417, 1024, %s419, %s402, 64, 64, 4
        $region44: #{tpu_custom_call.1} parent=31 // pred_fallthru
          _
      $region32: #{tpu_custom_call.1} parent=5 // pred_fallthru
        _
      %p425 = scmp.le.s32.totalorder 2, %s16
      // Predicated region
      $region45: #{tpu_custom_call.1} parent=5 // pred_check
        %p426 = pneg %p425
      $region46: #{tpu_custom_call.1} parent=5 // pred_check_branch
        %428 = sbr.rel (%p426) target = $region48
      $region47: #{tpu_custom_call.1} parent=5 // pred_region
        %s429 = ssub.s32 %s16, 2
        // Predicated region
        $region49: #{tpu_custom_call.1} parent=47 // pred_check
          %p430 = pneg %p129
        $region50: #{tpu_custom_call.1} parent=47 // pred_check_branch
          %432 = sbr.rel (%p430) target = $region52
        $region51: #{tpu_custom_call.1} parent=47 // pred_region
          %s433 = sand.u32 %s114, 1
          %s434 = scalar_lea.sflag [#allocation4], %s433
          %s435 = sand.u32 %s114, 1
          %s436 = smul.addr %s435, 64
          %s437 = scalar_lea.vmem [#allocation7], %s436
          %439 = dma.done %s434, 1024
        $region52: #{tpu_custom_call.1} parent=47 // pred_fallthru
          _
      $region48: #{tpu_custom_call.1} parent=5 // pred_fallthru
        _
    $region6: #{tpu_custom_call.1} parent=1 // loop_footer
      %s20 = sadd.s32 1, %s16
    $region7: #{tpu_custom_call.1} parent=1 // loop_footer_branch
      %15 = sbr.rel target = $region3
    $region8: #{tpu_custom_call.1} parent=1 // loop_exit
      _
    %440 = vsyncpa [#allocation3], 1
    %s441 = scalar_lea.sflag [#allocation3], 1
    %442 = vsyncpa %s441, 1
    %443 = vsyncpa [#allocation6], 1
    %444 = vsyncpa [#allocation4], 1
    %s445 = scalar_lea.sflag [#allocation4], 1
    %446 = vsyncpa %s445, 1

</llo_original>
